<compile_context>
chip_gen: v7x
topology: tpu7x:2x2x1
jax: 0.10.0
libtpu: 0.0.40
codegen_flags: <defaults>
</compile_context>

<pallas_src>
import functools

import jax
import jax.numpy as jnp
import numpy as np
from jax.experimental import pallas as pl
from jax.experimental.pallas import tpu as pltpu

_LANE = 128
_TM_DEFAULT = 512
_TN_DEFAULT = 512
_TK_DEFAULT = 512
_K_RESIDENT_MAX = 2048   # collapse the K grid axis when padded K <= this


def _round_up(x, m):
    return (x + m - 1) // m * m


def _pick_tile(dim_padded, desired, align=_LANE):
    """Largest multiple of `align` that is <= desired and divides dim_padded."""
    desired = max(align, (desired // align) * align)
    best = align
    t = align
    upper = min(desired, dim_padded)
    while t <= upper:
        if dim_padded % t == 0:
            best = t
        t += align
    return best


# ----------------------------- Pallas kernel --------------------------------
def _fc_kernel(x_ref, w_ref, b_ref, o_ref, *, apply_relu, n_k):
    # x_ref: (tm, tk) bf16   w_ref: (tk, tn) bf16   b_ref: (1, tn) f32
    # o_ref: (tm, tn) f32 -- doubles as the accumulator (resident across k).
    prod = jnp.dot(x_ref[...], w_ref[...], preferred_element_type=jnp.float32)

    if n_k == 1:
        out = prod + b_ref[...]
        if apply_relu:
            out = jnp.maximum(out, 0.0)
        o_ref[...] = out
        return

    k = pl.program_id(2)

    @pl.when(k == 0)
    def _():
        o_ref[...] = prod          # first K step: write, don't zero+add

    @pl.when(k > 0)
    def _():
        o_ref[...] += prod

    @pl.when(k == n_k - 1)
    def _():
        out = o_ref[...] + b_ref[...]     # bias broadcast over rows, f32
        if apply_relu:
            out = jnp.maximum(out, 0.0)
        o_ref[...] = out


# ------------------------- one-time parameter prep ---------------------------
def prepare_fc_params(weight, bias):
    """One-time: transpose to (in_dim, out_dim), zero-pad to lane multiples,
    cast weight to bf16 and bias to a (1, Np) f32 row.

    Do this at init / checkpoint-load time, NOT per forward call.
    Returns (w_t_padded_bf16, bias_padded_f32, out_dim).
    """
    weight = jnp.asarray(weight, jnp.float32)
    bias = jnp.asarray(bias, jnp.float32)
    out_dim, in_dim = weight.shape

    kp = _round_up(in_dim, _LANE)
    np_ = _round_up(out_dim, _LANE)

    w_t = weight.T
    if (kp, np_) != (in_dim, out_dim):
        w_t = jnp.pad(w_t, ((0, kp - in_dim), (0, np_ - out_dim)))
    w_t = w_t.astype(jnp.bfloat16)

    b = bias
    if np_ != out_dim:
        b = jnp.pad(b, (0, np_ - out_dim))
    b = b.reshape(1, np_).astype(jnp.float32)
    return w_t, b, out_dim


# ------------------------------- forward -------------------------------------
def fc_layer_forward(x, w_t_padded, bias_padded, out_dim, *, linear=False,
                     tm=_TM_DEFAULT, tn=_TN_DEFAULT, tk=_TK_DEFAULT,
                     k_resident_max=_K_RESIDENT_MAX):
    """Equivalent of fc_layer.forward with dropout=False (identity).

    x:            (batch, in_dim)  f32 or bf16 (bf16 avoids a per-call cast)
    w_t_padded:   (Kp, Np)         bf16, from prepare_fc_params
    bias_padded:  (1, Np)          f32,  from prepare_fc_params
    returns (batch, out_dim) float32
    """
    batch, in_dim = x.shape
    kp, np_ = w_t_padded.shape

    # Tile selection (all tiles divide the padded dims).
    tm_eff = min(_round_up(tm, 8), _round_up(batch, 8))
    tn_eff = _pick_tile(np_, tn)
    if kp <= k_resident_max:
        tk_eff = kp                        # whole reduction resident in VMEM
    else:
        tk_eff = _pick_tile(kp, tk)

    mp = _round_up(batch, tm_eff)

    # Keep >= 2 blocks on a parallel axis when possible (v7x has 2 TCs/chip).
    if (mp // tm_eff) * (np_ // tn_eff) == 1 and tn_eff % 256 == 0:
        tn_eff //= 2

    # Per-call activation pad / cast (keep activations bf16 end-to-end between
    # layers to skip the cast entirely).
    xp = x
    if mp != batch or kp != in_dim:
        xp = jnp.pad(xp, ((0, mp - batch), (0, kp - in_dim)))
    if xp.dtype != jnp.bfloat16:
        xp = xp.astype(jnp.bfloat16)

    grid = (mp // tm_eff, np_ // tn_eff, kp // tk_eff)
    n_k = grid[2]

    # Scoped-VMEM budget from the tiles: double-buffered bf16 inputs + f32 bias
    # + double-buffered resident f32 output block, plus compiler headroom.
    vmem_limit = 2 * (tm_eff * tk_eff * 2 + tk_eff * tn_eff * 2 + tn_eff * 4)
    vmem_limit += 2 * tm_eff * tn_eff * 4
    vmem_limit += 4 << 20
    vmem_limit = int(min(max(vmem_limit, 16 << 20), 48 << 20))

    kernel = functools.partial(_fc_kernel, apply_relu=not linear, n_k=n_k)

    out = pl.pallas_call(
        kernel,
        out_shape=jax.ShapeDtypeStruct((mp, np_), jnp.float32),
        grid_spec=pltpu.PrefetchScalarGridSpec(
            num_scalar_prefetch=0,
            grid=grid,
            in_specs=[
                pl.BlockSpec((tm_eff, tk_eff), lambda i, j, k: (i, k)),   # x
                pl.BlockSpec((tk_eff, tn_eff), lambda i, j, k: (k, j)),   # W^T
                pl.BlockSpec((1, tn_eff), lambda i, j, k: (0, j)),        # bias
            ],
            out_specs=pl.BlockSpec((tm_eff, tn_eff), lambda i, j, k: (i, j)),
        ),
        compiler_params=pltpu.CompilerParams(
            dimension_semantics=("parallel", "parallel", "arbitrary"),
            vmem_limit_bytes=vmem_limit),
    )(xp, w_t_padded, bias_padded)

    if mp != batch or np_ != out_dim:
        out = out[:batch, :out_dim]
    return out


# ------------------------- deterministic param init --------------------------
def init_fc_params(key, in_dim, out_dim, *, linear=False):
    """Returns weight in PyTorch layout (out_dim, in_dim) plus bias."""
    kw, kb = jax.random.split(key)
    if linear:
        limit = np.sqrt(3.0 / in_dim)                 # lecunn_uniform
    else:
        limit = np.sqrt(6.0 / (in_dim + out_dim))     # glorot_uniform
    weight = jax.random.uniform(
        kw, (out_dim, in_dim), jnp.float32, minval=-limit, maxval=limit)
    # nn.Linear default bias init: U(-1/sqrt(fan_in), 1/sqrt(fan_in))
    b_limit = 1.0 / np.sqrt(in_dim)
    bias = jax.random.uniform(
        kb, (out_dim,), jnp.float32, minval=-b_limit, maxval=b_limit)
    return weight, bias


# TODO(synk): nn.Dropout() (p=0.5, training mode) is not implemented; default
# construction uses dropout=False which is an identity, matching this kernel.

if __name__ == "__main__":
    key = jax.random.PRNGKey(0)

    # ----- case 1: small ReLU layer (module defaults: linear=False) ----------
    k_x, k_p, key = jax.random.split(key, 3)
    batch, in_dim, out_dim = 8, 32, 32
    x = jax.random.normal(k_x, (batch, in_dim), jnp.float32)
    weight, bias = init_fc_params(k_p, in_dim, out_dim, linear=False)
    w_t, b_row, odim = prepare_fc_params(weight, bias)   # once, outside hot path

    out = fc_layer_forward(x, w_t, b_row, odim, linear=False)
    out = jax.block_until_ready(out)
    ref = jnp.maximum(x @ weight.T + bias, 0.0)
    np.testing.assert_allclose(np.asarray(out), np.asarray(ref),
                               rtol=2e-2, atol=2e-2)

    # ----- case 2: odd dims, linear=True, force multi-K accumulation path ----
    k_x, k_p, key = jax.random.split(key, 3)
    batch, in_dim, out_dim = 20, 200, 72
    x2 = jax.random.normal(k_x, (batch, in_dim), jnp.float32)
    weight2, bias2 = init_fc_params(k_p, in_dim, out_dim, linear=True)
    w_t2, b_row2, odim2 = prepare_fc_params(weight2, bias2)

    out2 = fc_layer_forward(x2, w_t2, b_row2, odim2, linear=True,
                            tk=128, k_resident_max=0)     # exercise n_k > 1
    out2 = jax.block_until_ready(out2)
    ref2 = x2 @ weight2.T + bias2
    np.testing.assert_allclose(np.asarray(out2), np.asarray(ref2),
                               rtol=2e-2, atol=2e-2)

    print("KERNEL_OK")
</pallas_src>

<mosaic_0001>
module attributes {stable_mosaic.version = 11 : i64} {
  func.func @_fc_kernel(%arg0: i32, %arg1: i32, %arg2: i32, %arg3: memref<8x128xbf16, #tpu.memory_space<vmem>>, %arg4: memref<128x128xbf16, #tpu.memory_space<vmem>>, %arg5: memref<1x128xf32, #tpu.memory_space<vmem>>, %arg6: memref<8x128xf32, #tpu.memory_space<vmem>>) attributes {dimension_semantics = [#tpu.dimension_semantics<parallel>, #tpu.dimension_semantics<parallel>, #tpu.dimension_semantics<arbitrary>], iteration_bounds = array<i64: 1, 1, 1>, scalar_prefetch = 0 : i64, scratch_operands = 0 : i64, tpu.core_type = #tpu.core_type<tc>, window_params = [{transform_indices = @transform_0, window_bounds = array<i64: 8, 128>}, {transform_indices = @transform_1, window_bounds = array<i64: 128, 128>}, {transform_indices = @transform_2, window_bounds = array<i64: 1, 128>}, {transform_indices = @transform_3, window_bounds = array<i64: 8, 128>}]} {
    %c0 = arith.constant 0 : index
    %c0_0 = arith.constant 0 : index
    %0 = vector.load %arg3[%c0, %c0_0] : memref<8x128xbf16, #tpu.memory_space<vmem>>, vector<8x128xbf16>
    %c0_1 = arith.constant 0 : index
    %c0_2 = arith.constant 0 : index
    %1 = vector.load %arg4[%c0_1, %c0_2] : memref<128x128xbf16, #tpu.memory_space<vmem>>, vector<128x128xbf16>
    %cst = arith.constant dense<0.000000e+00> : vector<8x128xf32>
    %2 = tpu.matmul %0, %1, %cst {dimension_numbers = #tpu.dot_dimension_numbers<[1], [0], [0], [1], [0, 0, 1, 1], [], []>} : vector<8x128xbf16>, vector<128x128xbf16>, vector<8x128xf32> -> vector<8x128xf32>
    %c0_3 = arith.constant 0 : index
    %c0_4 = arith.constant 0 : index
    %3 = vector.load %arg5[%c0_3, %c0_4] : memref<1x128xf32, #tpu.memory_space<vmem>>, vector<1x128xf32>
    %4 = vector.broadcast %3 : vector<1x128xf32> to vector<8x128xf32>
    %5 = arith.addf %2, %4 : vector<8x128xf32>
    %cst_5 = arith.constant 0.000000e+00 : f32
    %6 = vector.broadcast %cst_5 : f32 to vector<8x128xf32>
    %7 = arith.maximumf %5, %6 : vector<8x128xf32>
    %c0_6 = arith.constant 0 : index
    %c0_7 = arith.constant 0 : index
    %8 = vector.load %arg6[%c0_6, %c0_7] : memref<8x128xf32, #tpu.memory_space<vmem>>, vector<8x128xf32>
    tpu.vector_store %arg6[%c0_6, %c0_7], %7 {strides = array<i32>} : memref<8x128xf32, #tpu.memory_space<vmem>>, vector<8x128xf32>,
    return
  }
  func.func @transform_0(%arg0: i32, %arg1: i32, %arg2: i32) -> (i32, i32) {
    %c0_i32 = arith.constant 0 : i32
    return %arg0, %arg2 : i32, i32
  }
  func.func @transform_1(%arg0: i32, %arg1: i32, %arg2: i32) -> (i32, i32) {
    %c0_i32 = arith.constant 0 : i32
    return %arg2, %arg1 : i32, i32
  }
  func.func @transform_2(%arg0: i32, %arg1: i32, %arg2: i32) -> (i32, i32) {
    %c0_i32 = arith.constant 0 : i32
    %c0_i32_0 = arith.constant 0 : i32
    return %c0_i32, %arg1 : i32, i32
  }
  func.func @transform_3(%arg0: i32, %arg1: i32, %arg2: i32) -> (i32, i32) {
    %c0_i32 = arith.constant 0 : i32
    return %arg0, %arg1 : i32, i32
  }
}

</mosaic_0001>

<llo_original>
// kernel: tpu_custom_call.1
$region0: #{tpu_custom_call.1}
  #allocation0 [shape = 'u32[]', space=smem, size = 0x4, offset = 0x4, fixed_abs, tag = 'smem constant byte address 0x4 - core index']
  #allocation1 [shape = 'u32[144,128]{1,0:T(1,128)}', space=vmem, size = 0x12000, scoped, tag = 'internal scratch']
  %s0 = inlined_call_operand.hbm [shape: bf16[8,128], index: 0, kind: input, shape index: {}]
  %s1 = inlined_call_operand.hbm [shape: bf16[128,128], index: 1, kind: input, shape index: {}]
  %s2 = inlined_call_operand.vmem [shape: f32[1,128], index: 2, kind: input, shape index: {}]
  %s3 = inlined_call_operand.hbm [shape: f32[8,128], index: 3, kind: output, shape index: {}]
  %s4 = sld [smem:[#allocation0]]
  $region30: #{tpu_custom_call.1} parent=0
    _
  %s6 = ssub.s32 1, %s4
  %s7 = scalar_select 0, %s6, %s4
  $region1: #{tpu_custom_call.1} parent=0
    #allocation2 [shape = 'u8[2048]{0}', space=vmem, size = 0x800, scoped, tag = 'input window, operand 0, single buffered']
    #allocation3 [shape = 's32[1]{0}', space=sflag, size = 0x4, scoped, tag = 'scoped memory for tpu_custom_call.1']
    #allocation4 [shape = 's32[1]{0}', space=sflag, size = 0x4, scoped, tag = 'scoped memory for tpu_custom_call.1']
    #allocation5 [shape = 'u8[32768]{0}', space=vmem, size = 0x8000, scoped, tag = 'input window, operand 1, single buffered']
    #allocation6 [shape = 's32[1]{0}', space=sflag, size = 0x4, scoped, tag = 'scoped memory for tpu_custom_call.1']
    #allocation7 [shape = 'u8[4096]{0}', space=vmem, size = 0x1000, scoped, tag = 'output window, operand 0, single buffered']
    %8 = vsyncpa [#allocation3], 0
    %9 = vsyncpa [#allocation6], 0
    %10 = vsyncpa [#allocation4], 0
    // Predicated region
    $region2: #{tpu_custom_call.1} parent=1 // pred_check
      _
    $region3: #{tpu_custom_call.1} parent=1 // pred_check_branch
      %12 = sbr.rel (0) target = $region5
    $region4: #{tpu_custom_call.1} parent=1 // pred_region
      %s14 = ssub.s32 64, 64
      %15 = vsyncadd [#allocation3], %s14
      %s17 = sshll.u32 [#allocation2], 4
      %s18 = int_to_ptr.vmem [resolvable:$true] %s17
      %20 = dma.hbm_to_vmem [thread:$0]  %s0, 64, %s18, [#allocation3]
    $region5: #{tpu_custom_call.1} parent=1 // pred_fallthru
      _
    // Predicated region
    $region6: #{tpu_custom_call.1} parent=1 // pred_check
      _
    $region7: #{tpu_custom_call.1} parent=1 // pred_check_branch
      %22 = sbr.rel (0) target = $region9
    $region8: #{tpu_custom_call.1} parent=1 // pred_region
      %s24 = ssub.s32 1024, 1024
      %25 = vsyncadd [#allocation6], %s24
      %s26 = sshll.u32 [#allocation5], 4
      %s27 = int_to_ptr.vmem [resolvable:$true] %s26
      %32 = dma.hbm_to_vmem [thread:$0]  %s1, 1024, %s27, [#allocation6], 64, 64, 4
    $region9: #{tpu_custom_call.1} parent=1 // pred_fallthru
      _
    // Predicated region
    $region10: #{tpu_custom_call.1} parent=1 // pred_check
      _
    $region11: #{tpu_custom_call.1} parent=1 // pred_check_branch
      %34 = sbr.rel (0) target = $region13
    $region12: #{tpu_custom_call.1} parent=1 // pred_region
      _
    $region13: #{tpu_custom_call.1} parent=1 // pred_fallthru
      _
    // Predicated region
    $region14: #{tpu_custom_call.1} parent=1 // pred_check
      _
    $region15: #{tpu_custom_call.1} parent=1 // pred_check_branch
      %36 = sbr.rel (0) target = $region17
    $region16: #{tpu_custom_call.1} parent=1 // pred_region
      %37 = dma.done [#allocation3], 64
    $region17: #{tpu_custom_call.1} parent=1 // pred_fallthru
      _
    // Predicated region
    $region18: #{tpu_custom_call.1} parent=1 // pred_check
      _
    $region19: #{tpu_custom_call.1} parent=1 // pred_check_branch
      %39 = sbr.rel (0) target = $region21
    $region20: #{tpu_custom_call.1} parent=1 // pred_region
      %40 = dma.done [#allocation6], 1024
    $region21: #{tpu_custom_call.1} parent=1 // pred_fallthru
      _
    %v42 = vld [vmem:[#allocation2] sm:$0xf]
    %v43 = vld [vmem:[#allocation5] sm:$0xf]
    %v44 = vld [vmem:[#allocation5 + $0x4] sm:$0xf]
    %v45 = vld [vmem:[#allocation5 + $0x8] sm:$0xf]
    %v46 = vld [vmem:[#allocation5 + $0xc] sm:$0xf]
    %v47 = vld [vmem:[#allocation5 + $0x10] sm:$0xf]
    %v48 = vld [vmem:[#allocation5 + $0x14] sm:$0xf]
    %v49 = vld [vmem:[#allocation5 + $0x18] sm:$0xf]
    %v50 = vld [vmem:[#allocation5 + $0x1c] sm:$0xf]
    %v51 = vld [vmem:[#allocation5 + $0x20] sm:$0xf]
    %v52 = vld [vmem:[#allocation5 + $0x24] sm:$0xf]
    %v53 = vld [vmem:[#allocation5 + $0x28] sm:$0xf]
    %v54 = vld [vmem:[#allocation5 + $0x2c] sm:$0xf]
    %v55 = vld [vmem:[#allocation5 + $0x30] sm:$0xf]
    %v56 = vld [vmem:[#allocation5 + $0x34] sm:$0xf]
    %v57 = vld [vmem:[#allocation5 + $0x38] sm:$0xf]
    %v58 = vld [vmem:[#allocation5 + $0x3c] sm:$0xf]
    %v59 = vld [vmem:[%s2] sm:$0x1]
    %v61 = vlaneseq
    %v62 = vshrl.u32 %v61, 7
    %v63 = vsub.s32 0, %v62
    %v64 = vrot.slane %v59, %v63
    %v82 = vunpack.c.l.b16 %v43
    %v83 = vunpack.c.l.b16 %v44
    %v84 = vunpack.c.l.b16 %v45
    %v85 = vunpack.c.l.b16 %v46
    %v86 = vunpack.c.l.b16 %v47
    %v87 = vunpack.c.l.b16 %v48
    %v88 = vunpack.c.l.b16 %v49
    %v89 = vunpack.c.l.b16 %v50
    %v90 = vunpack.c.l.b16 %v51
    %v91 = vunpack.c.l.b16 %v52
    %v92 = vunpack.c.l.b16 %v53
    %v93 = vunpack.c.l.b16 %v54
    %v94 = vunpack.c.l.b16 %v55
    %v95 = vunpack.c.l.b16 %v56
    %v96 = vunpack.c.l.b16 %v57
    %v97 = vunpack.c.l.b16 %v58
    %v98 = vpack.c.b16 %v83, %v82
    %v99 = vpack.c.b16 %v85, %v84
    %v100 = vpack.c.b16 %v87, %v86
    %v101 = vpack.c.b16 %v89, %v88
    %v102 = vpack.c.b16 %v91, %v90
    %v103 = vpack.c.b16 %v93, %v92
    %v104 = vpack.c.b16 %v95, %v94
    %v105 = vpack.c.b16 %v97, %v96
    %114 = vmatprep.subr.bf16.mxu0 0
    %115 = vmatpush1.bf16.msra.mxu0 %v98
    %116 = vmatprep.subr.bf16.mxu0 0
    %117 = vmatpush1.bf16.msra.mxu0 %v99
    %118 = vmatprep.subr.bf16.mxu0 0
    %119 = vmatpush1.bf16.msra.mxu0 %v100
    %120 = vmatprep.subr.bf16.mxu0 0
    %121 = vmatpush1.bf16.msra.mxu0 %v101
    %122 = vmatprep.subr.bf16.mxu0 0
    %123 = vmatpush1.bf16.msra.mxu0 %v102
    %124 = vmatprep.subr.bf16.mxu0 0
    %125 = vmatpush1.bf16.msra.mxu0 %v103
    %126 = vmatprep.subr.bf16.mxu0 0
    %127 = vmatpush1.bf16.msra.mxu0 %v104
    %128 = vmatprep.subr.bf16.mxu0 0
    %129 = vmatpush1.bf16.msra.mxu0 %v105
    %130 = vmatprep.subr.bf16.mxu0 0
    %131 = vmatpush1.bf16.msra.mxu0 0
    %132 = vmatprep.subr.bf16.mxu0 0
    %133 = vmatpush1.bf16.msra.mxu0 0
    %134 = vmatprep.subr.bf16.mxu0 0
    %135 = vmatpush1.bf16.msra.mxu0 0
    %136 = vmatprep.subr.bf16.mxu0 0
    %137 = vmatpush1.bf16.msra.mxu0 0
    %138 = vmatprep.subr.bf16.mxu0 0
    %139 = vmatpush1.bf16.msra.mxu0 0
    %140 = vmatprep.subr.bf16.mxu0 0
    %141 = vmatpush1.bf16.msra.mxu0 0
    %142 = vmatprep.subr.bf16.mxu0 0
    %143 = vmatpush1.bf16.msra.mxu0 0
    %144 = vmatprep.subr.bf16.mxu0 0
    %145 = vmatpush1.bf16.msra.mxu0 0
    %146 = vmatprep.mubr.bf16.mxu0 0
    %147 = vmatmul.mubr.bf16.gmra.mrb[0].mxu0 %v42
    %v148 = vpop.f32.mrb[0].mxu0
    %v149 = vadd.f32 %v64, %v148
    %v150 = vpop.f32.mrb[0].mxu0
    %v151 = vpop.f32.mrb[0].mxu0
    %v152 = vpop.f32.mrb[0].mxu0
    %153 = vdwg.mxu0
    %v154 = vmax.f32 %v149, 0.0
    %155 = vst [vmem:[#allocation7] sm:$0xff] %v154
    // Predicated region
    $region22: #{tpu_custom_call.1} parent=1 // pred_check
      _
    $region23: #{tpu_custom_call.1} parent=1 // pred_check_branch
      %157 = sbr.rel (0) target = $region25
    $region24: #{tpu_custom_call.1} parent=1 // pred_region
      %s159 = ssub.s32 128, 128
      %160 = vsyncadd [#allocation4], %s159
      %s162 = sshll.u32 [#allocation7], 4
      %s163 = int_to_ptr.vmem [resolvable:$true] %s162
      %165 = dma.vmem_to_hbm [thread:$0]  %s163, 128, %s3, [#allocation4]
    $region25: #{tpu_custom_call.1} parent=1 // pred_fallthru
      _
    // Predicated region
    $region26: #{tpu_custom_call.1} parent=1 // pred_check
      _
    $region27: #{tpu_custom_call.1} parent=1 // pred_check_branch
      %167 = sbr.rel (0) target = $region29
    $region28: #{tpu_custom_call.1} parent=1 // pred_region
      %168 = dma.done [#allocation4], 128
    $region29: #{tpu_custom_call.1} parent=1 // pred_fallthru
      _
    %169 = vsyncpa [#allocation3], 1
    %170 = vsyncpa [#allocation6], 1
    %171 = vsyncpa [#allocation4], 1

</llo_original>
